<compile_context>
chip_gen: v7x
topology: tpu7x:2x2x1
jax: 0.10.0
libtpu: 0.0.40
codegen_flags: <defaults>
</compile_context>

<pallas_src>
import zlib

import jax
import jax.numpy as jnp
from jax import lax
from jax.experimental import pallas as pl
from jax.experimental.pallas import tpu as pltpu


# ----------------------------------------------------------------------------
# Fused Pallas kernel: conv3x3 -> relu -> conv3x3 -> +residual -> avgpool -> linear
# ----------------------------------------------------------------------------

def _fused_dag_kernel(xp_ref, m1_ref, b1_ref, m2_ref, b2_ref, w3_ref, b3_ref,
                      o_ref, pad2_ref):
    """One batch element per grid step.

    xp_ref  : (1, H+2, W*Cin)   row-padded input image, lanes = (w, cin)
    m1_ref  : (3, W*Cin, W*C1)  conv1 row-band matrices (kw taps + channels folded in)
    b1_ref  : (1, W*C1)         conv1 bias tiled across lanes
    m2_ref  : (3, W*C1, W*C1)   conv2 row-band matrices
    b2_ref  : (1, W*C1)         conv2 bias tiled across lanes
    w3_ref  : (W*C1, F)         head weight with the global-avg-pool 1/HW folded in
    b3_ref  : (1, F)
    o_ref   : (1, 1, F)
    pad2_ref: (H+2, W*C1)       VMEM scratch: row-padded relu1 output
    """
    H = pad2_ref.shape[0] - 2
    WC1 = pad2_ref.shape[1]

    # conv1 + bias + relu : three row-band MXU matmuls, lane-dense (H, W*C1) output.
    # The MXU accumulates natively across the three pushes (f32 accumulator).
    h1 = jnp.dot(xp_ref[0, 0:H, :], m1_ref[0], preferred_element_type=jnp.float32)
    h1 = h1 + jnp.dot(xp_ref[0, 1:H + 1, :], m1_ref[1],
                      preferred_element_type=jnp.float32)
    h1 = h1 + jnp.dot(xp_ref[0, 2:H + 2, :], m1_ref[2],
                      preferred_element_type=jnp.float32)
    h1 = jnp.maximum(h1 + b1_ref[...], 0.0)          # fused bias + relu epilogue

    # Stage the row-padded relu1 output in VMEM (never round-trips to HBM).
    # Only the two halo rows need zeroing; the interior is fully overwritten.
    zrow = jnp.zeros((1, WC1), jnp.float32)
    pad2_ref[0:1, :] = zrow
    pad2_ref[H + 1:H + 2, :] = zrow
    pad2_ref[1:H + 1, :] = h1

    # conv2 + bias + residual add (with relu1 output), all VMEM resident.
    y = jnp.dot(pad2_ref[0:H, :], m2_ref[0], preferred_element_type=jnp.float32)
    y = y + jnp.dot(pad2_ref[1:H + 1, :], m2_ref[1],
                    preferred_element_type=jnp.float32)
    y = y + jnp.dot(pad2_ref[2:H + 2, :], m2_ref[2],
                    preferred_element_type=jnp.float32)
    y = y + b2_ref[...] + h1                          # fused bias + residual epilogue

    # global average pool (1/HW folded into w3) + linear head
    pooled = jnp.sum(y, axis=0, keepdims=True)        # (1, W*C1), lane-dense XLU reduce
    o_ref[0] = (jnp.dot(pooled, w3_ref[...], preferred_element_type=jnp.float32)
                + b3_ref[...])


def _conv_band_weights(w_hwio, W):
    """(3,3,Cin,Cout) conv kernel -> (3, W*Cin, W*Cout) row-band matmul operands.

    band[kh][(c+kw-1)*Cin + i, c*Cout + o] = w[kh, kw, i, o], zero where c+kw-1 falls
    outside [0, W) (this implements the width-wise 'same' padding inside the matmul).
    """
    bands = []
    for kh in range(3):
        m = jnp.zeros((W * w_hwio.shape[2], W * w_hwio.shape[3]), jnp.float32)
        for kw in range(3):
            shift = jnp.eye(W, k=1 - kw, dtype=jnp.float32)   # ones at (c+kw-1, c)
            m = m + jnp.kron(shift, w_hwio[kh, kw])
        bands.append(m)
    return jnp.stack(bands, axis=0)


@jax.jit
def fused_dag_forward(x_nhwc, m1, b1r, m2, b2r, w3p, b3):
    """x_nhwc: (N,H,W,Cin).  Weight operands are pre-transformed (see _conv_band_weights)."""
    N, H, W, Cin = x_nhwc.shape
    WC1 = m1.shape[-1]
    F = w3p.shape[-1]

    x2d = x_nhwc.reshape(N, H, W * Cin)             # lanes = (w, cin)
    xpad = jnp.pad(x2d, ((0, 0), (1, 1), (0, 0)))   # height-wise 'same' padding only

    # NOTE: operands kept float32 to preserve the PyTorch module's numerics; on v6e/v7x
    # the matmul inputs could be cast to bfloat16 (f32 accumulate) for ~2x MXU throughput.
    out = pl.pallas_call(
        _fused_dag_kernel,
        out_shape=jax.ShapeDtypeStruct((N, 1, F), jnp.float32),
        grid=(N,),
        in_specs=[
            pl.BlockSpec((1, H + 2, W * Cin), lambda n: (n, 0, 0)),
            pl.BlockSpec((3, W * Cin, WC1), lambda n: (0, 0, 0)),
            pl.BlockSpec((1, WC1), lambda n: (0, 0)),
            pl.BlockSpec((3, WC1, WC1), lambda n: (0, 0, 0)),
            pl.BlockSpec((1, WC1), lambda n: (0, 0)),
            pl.BlockSpec((WC1, F), lambda n: (0, 0)),
            pl.BlockSpec((1, F), lambda n: (0, 0)),
        ],
        out_specs=pl.BlockSpec((1, 1, F), lambda n: (n, 0, 0)),
        scratch_shapes=[pltpu.VMEM((H + 2, WC1), jnp.float32)],
        compiler_params=pltpu.CompilerParams(
            dimension_semantics=("parallel",)),     # batch axis -> both v7x TensorCores
    )(xpad, m1, b1r, m2, b2r, w3p, b3)
    return out.reshape(N, F)


# ----------------------------------------------------------------------------
# Module registry + modules (deterministic in-script parameter init)
# ----------------------------------------------------------------------------

def _param_key(name: str):
    return jax.random.fold_in(jax.random.PRNGKey(0),
                              zlib.crc32(name.encode()) & 0x7FFFFFFF)


class ModuleRegistry:
    _registry = {}

    @classmethod
    def register(cls, cls_name):
        def deco(klass):
            cls._registry[cls_name] = klass
            return klass
        return deco

    @classmethod
    def build(cls, cls_name, module_name, **config):
        return cls._registry[cls_name](module_name, **config)


@ModuleRegistry.register('Conv2d3x3')
class Conv2d3x3Module:
    out_varname = 'out'

    def __init__(self, name, in_ch, out_ch):
        self.name = name
        k1, k2 = jax.random.split(_param_key(name))
        fan_in = float(in_ch * 9)
        self.w = jax.random.normal(k1, (3, 3, in_ch, out_ch), jnp.float32) / jnp.sqrt(fan_in)
        self.b = 0.01 * jax.random.normal(k2, (1, out_ch), jnp.float32)


@ModuleRegistry.register('ReLU')
class ReLUModule:
    out_varname = 'out'

    def __init__(self, name):
        self.name = name


@ModuleRegistry.register('Add')
class AddModule:
    out_varname = 'out'

    def __init__(self, name):
        self.name = name


@ModuleRegistry.register('PoolLinear')
class PoolLinearModule:
    out_varname = 'out'

    def __init__(self, name, in_feat, out_feat):
        self.name = name
        k1, k2 = jax.random.split(_param_key(name))
        self.w = jax.random.normal(k1, (in_feat, out_feat), jnp.float32) / jnp.sqrt(float(in_feat))
        self.b = 0.01 * jax.random.normal(k2, (1, out_feat), jnp.float32)


# ----------------------------------------------------------------------------
# ComposableModel: faithful graph machinery; the configured DAG runs as one fused kernel
# ----------------------------------------------------------------------------

class ComposableModel:
    """Build full model based on config file (JAX/Pallas version)."""

    _FUSED_SEQ = ['conv1', 'relu1', 'conv2', 'add1', 'head']

    def __init__(self, model_name, config):
        self.name = model_name
        self._module_info = {}
        self._inp_num = {}
        self._des = {}
        self._modules = {}
        self._build(config)
        self._op_seq = self._forward_dry_run()
        self._fused_cache = {}
        # The whole configured DAG is executed by a single fused Pallas kernel.
        # TODO(synk): arbitrary configs would need generic per-module fallback kernels.
        assert self._op_seq == self._FUSED_SEQ, self._op_seq
        assert self._module_info['add1']['inp_src'] == ['conv2:out', 'relu1:out']

    def _build(self, config_list):
        for module_config in config_list:
            self._build_module(module_config)

    def _build_module(self, module_config):
        module_name = module_config['name']
        self._module_info[module_name] = {}
        if module_name not in ['entry', 'exit']:
            cls_name = module_config['cls']
            module = ModuleRegistry.build(cls_name, module_name, **module_config['config'])
            self._modules[module_name] = module
        self._module_info[module_name]['inp_src'] = module_config['inp_src']
        self._inp_num[module_name] = len(module_config['inp_src'])
        if module_name not in ['entry', 'exit']:
            for iarg, src in enumerate(module_config['inp_src']):
                if src not in self._des:
                    self._des[src] = []
                self._des[src].append(f'{module_name}:{iarg}')

    def _forward_dry_run(self):
        op_seq = []
        inp_cntr = {name: 0 for name in self._module_info.keys()}
        q = ['entry']
        while len(q) > 0:
            module_name = q.pop(0)
            if module_name == 'entry':
                n_input = self._inp_num[module_name]
                out_varname = [f'args:{i}' for i in range(n_input)]
            else:
                out_varname = [f'{module_name}:{self._modules[module_name].out_varname}']
            for varname in out_varname:
                if varname not in self._des:
                    continue
                for des in self._des[varname]:
                    des_module_name, _ = des.split(':')
                    inp_cntr[des_module_name] += 1
                    if inp_cntr[des_module_name] == self._inp_num[des_module_name]:
                        q.append(des_module_name)
            if module_name not in ['entry', 'exit']:
                op_seq.append(module_name)
        return op_seq

    def _fused_params(self, H, W):
        key = (H, W)
        if key not in self._fused_cache:
            c1 = self._modules['conv1']
            c2 = self._modules['conv2']
            hd = self._modules['head']
            self._fused_cache[key] = (
                _conv_band_weights(c1.w, W), jnp.tile(c1.b, (1, W)),
                _conv_band_weights(c2.w, W), jnp.tile(c2.b, (1, W)),
                jnp.tile(hd.w, (W, 1)) / float(H * W), hd.b)
        return self._fused_cache[key]

    def forward(self, *args):
        module_output = {f'args:{i}': a for i, a in enumerate(args)}
        x = module_output[self._module_info['conv1']['inp_src'][0]]   # (N,H,W,Cin)
        _, H, W, _ = x.shape
        module_output['head:out'] = fused_dag_forward(x, *self._fused_params(H, W))
        final_output = {}
        for des, src in self._module_info['exit']['inp_src'].items():
            final_output[des] = module_output[src]
        return final_output


# Representative config (entry -> conv -> relu -> conv -> residual add -> pool+fc -> exit)
CONFIG = [
    {'name': 'entry', 'inp_src': ['x']},
    {'name': 'conv1', 'cls': 'Conv2d3x3', 'config': {'in_ch': 4, 'out_ch': 8},
     'inp_src': ['args:0']},
    {'name': 'relu1', 'cls': 'ReLU', 'config': {}, 'inp_src': ['conv1:out']},
    {'name': 'conv2', 'cls': 'Conv2d3x3', 'config': {'in_ch': 8, 'out_ch': 8},
     'inp_src': ['relu1:out']},
    {'name': 'add1', 'cls': 'Add', 'config': {}, 'inp_src': ['conv2:out', 'relu1:out']},
    {'name': 'head', 'cls': 'PoolLinear', 'config': {'in_feat': 8, 'out_feat': 32},
     'inp_src': ['add1:out']},
    {'name': 'exit', 'inp_src': {'y': 'head:out'}},
]


if __name__ == "__main__":
    key = jax.random.PRNGKey(0)
    x_nchw = jax.random.normal(key, (2, 4, 16, 16), jnp.float32)   # PyTorch-style NCHW
    x = jnp.transpose(x_nchw, (0, 2, 3, 1))                        # kernel path uses NHWC

    model = ComposableModel('demo', CONFIG)
    out = model.forward(x)
    y = out['y']
    jax.block_until_ready(y)

    # Pure-JAX (XLA) reference of the same DAG as a correctness check.
    c1, c2, hd = (model._modules[n] for n in ('conv1', 'conv2', 'head'))
    dn = ('NHWC', 'HWIO', 'NHWC')
    h = lax.conv_general_dilated(x, c1.w, (1, 1), 'SAME', dimension_numbers=dn,
                                 precision=lax.Precision.HIGHEST)
    h = jnp.maximum(h + c1.b.reshape(1, 1, 1, -1), 0.0)
    r = lax.conv_general_dilated(h, c2.w, (1, 1), 'SAME', dimension_numbers=dn,
                                 precision=lax.Precision.HIGHEST)
    r = r + c2.b.reshape(1, 1, 1, -1) + h
    ref = jnp.mean(r, axis=(1, 2)) @ hd.w + hd.b

    assert y.shape == (2, 32) and y.dtype == jnp.float32
    assert bool(jnp.all(jnp.isfinite(y)))
    assert bool(jnp.allclose(y, ref, rtol=1e-2, atol=1e-2)), \
        float(jnp.max(jnp.abs(y - ref)))
    print("KERNEL_OK")
</pallas_src>

<mosaic_0001>
module attributes {stable_mosaic.version = 11 : i64} {
  func.func @_fused_dag_kernel(%arg0: i32, %arg1: memref<1x18x64xf32, #tpu.memory_space<vmem>>, %arg2: memref<3x64x128xf32, #tpu.memory_space<vmem>>, %arg3: memref<1x128xf32, #tpu.memory_space<vmem>>, %arg4: memref<3x128x128xf32, #tpu.memory_space<vmem>>, %arg5: memref<1x128xf32, #tpu.memory_space<vmem>>, %arg6: memref<128x32xf32, #tpu.memory_space<vmem>>, %arg7: memref<1x32xf32, #tpu.memory_space<vmem>>, %arg8: memref<1x1x32xf32, #tpu.memory_space<vmem>>, %arg9: memref<18x128xf32, #tpu.memory_space<vmem>>) attributes {dimension_semantics = [#tpu.dimension_semantics<parallel>], iteration_bounds = array<i64: 2>, scalar_prefetch = 0 : i64, scratch_operands = 1 : i64, tpu.core_type = #tpu.core_type<tc>, window_params = [{transform_indices = @transform_0, window_bounds = array<i64: 1, 18, 64>}, {pipeline_mode = #tpu.pipeline_mode<synchronous>, transform_indices = @transform_1, window_bounds = array<i64: 3, 64, 128>}, {pipeline_mode = #tpu.pipeline_mode<synchronous>, transform_indices = @transform_2, window_bounds = array<i64: 1, 128>}, {pipeline_mode = #tpu.pipeline_mode<synchronous>, transform_indices = @transform_3, window_bounds = array<i64: 3, 128, 128>}, {pipeline_mode = #tpu.pipeline_mode<synchronous>, transform_indices = @transform_4, window_bounds = array<i64: 1, 128>}, {pipeline_mode = #tpu.pipeline_mode<synchronous>, transform_indices = @transform_5, window_bounds = array<i64: 128, 32>}, {pipeline_mode = #tpu.pipeline_mode<synchronous>, transform_indices = @transform_6, window_bounds = array<i64: 1, 32>}, {transform_indices = @transform_7, window_bounds = array<i64: 1, 1, 32>}]} {
    %c0 = arith.constant 0 : index
    %c0_0 = arith.constant 0 : index
    %c0_1 = arith.constant 0 : index
    %0 = vector.load %arg1[%c0, %c0_0, %c0_1] : memref<1x18x64xf32, #tpu.memory_space<vmem>>, vector<1x16x64xf32>
    %1 = vector.shape_cast %0 : vector<1x16x64xf32> to vector<16x64xf32>
    %c0_2 = arith.constant 0 : index
    %c0_3 = arith.constant 0 : index
    %c0_4 = arith.constant 0 : index
    %2 = vector.load %arg2[%c0_2, %c0_3, %c0_4] : memref<3x64x128xf32, #tpu.memory_space<vmem>>, vector<1x64x128xf32>
    %3 = vector.shape_cast %2 : vector<1x64x128xf32> to vector<64x128xf32>
    %cst = arith.constant dense<0.000000e+00> : vector<16x128xf32>
    %4 = tpu.matmul %1, %3, %cst {dimension_numbers = #tpu.dot_dimension_numbers<[1], [0], [0], [1], [0, 0, 1, 1], [], []>} : vector<16x64xf32>, vector<64x128xf32>, vector<16x128xf32> -> vector<16x128xf32>
    %c0_5 = arith.constant 0 : index
    %c1 = arith.constant 1 : index
    %c0_6 = arith.constant 0 : index
    %5 = vector.load %arg1[%c0_5, %c1, %c0_6] : memref<1x18x64xf32, #tpu.memory_space<vmem>>, vector<1x16x64xf32>
    %6 = vector.shape_cast %5 : vector<1x16x64xf32> to vector<16x64xf32>
    %c1_7 = arith.constant 1 : index
    %c0_8 = arith.constant 0 : index
    %c0_9 = arith.constant 0 : index
    %7 = vector.load %arg2[%c1_7, %c0_8, %c0_9] : memref<3x64x128xf32, #tpu.memory_space<vmem>>, vector<1x64x128xf32>
    %8 = vector.shape_cast %7 : vector<1x64x128xf32> to vector<64x128xf32>
    %cst_10 = arith.constant dense<0.000000e+00> : vector<16x128xf32>
    %9 = tpu.matmul %6, %8, %cst_10 {dimension_numbers = #tpu.dot_dimension_numbers<[1], [0], [0], [1], [0, 0, 1, 1], [], []>} : vector<16x64xf32>, vector<64x128xf32>, vector<16x128xf32> -> vector<16x128xf32>
    %10 = arith.addf %4, %9 : vector<16x128xf32>
    %c0_11 = arith.constant 0 : index
    %c2 = arith.constant 2 : index
    %c0_12 = arith.constant 0 : index
    %11 = vector.load %arg1[%c0_11, %c2, %c0_12] : memref<1x18x64xf32, #tpu.memory_space<vmem>>, vector<1x16x64xf32>
    %12 = vector.shape_cast %11 : vector<1x16x64xf32> to vector<16x64xf32>
    %c2_13 = arith.constant 2 : index
    %c0_14 = arith.constant 0 : index
    %c0_15 = arith.constant 0 : index
    %13 = vector.load %arg2[%c2_13, %c0_14, %c0_15] : memref<3x64x128xf32, #tpu.memory_space<vmem>>, vector<1x64x128xf32>
    %14 = vector.shape_cast %13 : vector<1x64x128xf32> to vector<64x128xf32>
    %cst_16 = arith.constant dense<0.000000e+00> : vector<16x128xf32>
    %15 = tpu.matmul %12, %14, %cst_16 {dimension_numbers = #tpu.dot_dimension_numbers<[1], [0], [0], [1], [0, 0, 1, 1], [], []>} : vector<16x64xf32>, vector<64x128xf32>, vector<16x128xf32> -> vector<16x128xf32>
    %16 = arith.addf %10, %15 : vector<16x128xf32>
    %c0_17 = arith.constant 0 : index
    %c0_18 = arith.constant 0 : index
    %17 = vector.load %arg3[%c0_17, %c0_18] : memref<1x128xf32, #tpu.memory_space<vmem>>, vector<1x128xf32>
    %18 = vector.broadcast %17 : vector<1x128xf32> to vector<16x128xf32>
    %19 = arith.addf %16, %18 : vector<16x128xf32>
    %cst_19 = arith.constant 0.000000e+00 : f32
    %20 = vector.broadcast %cst_19 : f32 to vector<16x128xf32>
    %21 = arith.maximumf %19, %20 : vector<16x128xf32>
    %cst_20 = arith.constant 0.000000e+00 : f32
    %22 = vector.broadcast %cst_20 : f32 to vector<1x128xf32>
    %c0_21 = arith.constant 0 : index
    %c0_22 = arith.constant 0 : index
    %23 = vector.load %arg9[%c0_21, %c0_22] : memref<18x128xf32, #tpu.memory_space<vmem>>, vector<1x128xf32>
    tpu.vector_store %arg9[%c0_21, %c0_22], %22 {strides = array<i32>} : memref<18x128xf32, #tpu.memory_space<vmem>>, vector<1x128xf32>,
    %c17 = arith.constant 17 : index
    %c0_23 = arith.constant 0 : index
    %24 = vector.load %arg9[%c17, %c0_23] : memref<18x128xf32, #tpu.memory_space<vmem>>, vector<1x128xf32>
    tpu.vector_store %arg9[%c17, %c0_23], %22 {strides = array<i32>} : memref<18x128xf32, #tpu.memory_space<vmem>>, vector<1x128xf32>,
    %c1_24 = arith.constant 1 : index
    %c0_25 = arith.constant 0 : index
    %25 = vector.load %arg9[%c1_24, %c0_25] : memref<18x128xf32, #tpu.memory_space<vmem>>, vector<16x128xf32>
    tpu.vector_store %arg9[%c1_24, %c0_25], %21 {strides = array<i32>} : memref<18x128xf32, #tpu.memory_space<vmem>>, vector<16x128xf32>,
    %c0_26 = arith.constant 0 : index
    %c0_27 = arith.constant 0 : index
    %26 = vector.load %arg9[%c0_26, %c0_27] : memref<18x128xf32, #tpu.memory_space<vmem>>, vector<16x128xf32>
    %c0_28 = arith.constant 0 : index
    %c0_29 = arith.constant 0 : index
    %c0_30 = arith.constant 0 : index
    %27 = vector.load %arg4[%c0_28, %c0_29, %c0_30] : memref<3x128x128xf32, #tpu.memory_space<vmem>>, vector<1x128x128xf32>
    %28 = vector.shape_cast %27 : vector<1x128x128xf32> to vector<128x128xf32>
    %cst_31 = arith.constant dense<0.000000e+00> : vector<16x128xf32>
    %29 = tpu.matmul %26, %28, %cst_31 {dimension_numbers = #tpu.dot_dimension_numbers<[1], [0], [0], [1], [0, 0, 1, 1], [], []>} : vector<16x128xf32>, vector<128x128xf32>, vector<16x128xf32> -> vector<16x128xf32>
    %c1_32 = arith.constant 1 : index
    %c0_33 = arith.constant 0 : index
    %30 = vector.load %arg9[%c1_32, %c0_33] : memref<18x128xf32, #tpu.memory_space<vmem>>, vector<16x128xf32>
    %c1_34 = arith.constant 1 : index
    %c0_35 = arith.constant 0 : index
    %c0_36 = arith.constant 0 : index
    %31 = vector.load %arg4[%c1_34, %c0_35, %c0_36] : memref<3x128x128xf32, #tpu.memory_space<vmem>>, vector<1x128x128xf32>
    %32 = vector.shape_cast %31 : vector<1x128x128xf32> to vector<128x128xf32>
    %cst_37 = arith.constant dense<0.000000e+00> : vector<16x128xf32>
    %33 = tpu.matmul %30, %32, %cst_37 {dimension_numbers = #tpu.dot_dimension_numbers<[1], [0], [0], [1], [0, 0, 1, 1], [], []>} : vector<16x128xf32>, vector<128x128xf32>, vector<16x128xf32> -> vector<16x128xf32>
    %34 = arith.addf %29, %33 : vector<16x128xf32>
    %c2_38 = arith.constant 2 : index
    %c0_39 = arith.constant 0 : index
    %35 = vector.load %arg9[%c2_38, %c0_39] : memref<18x128xf32, #tpu.memory_space<vmem>>, vector<16x128xf32>
    %c2_40 = arith.constant 2 : index
    %c0_41 = arith.constant 0 : index
    %c0_42 = arith.constant 0 : index
    %36 = vector.load %arg4[%c2_40, %c0_41, %c0_42] : memref<3x128x128xf32, #tpu.memory_space<vmem>>, vector<1x128x128xf32>
    %37 = vector.shape_cast %36 : vector<1x128x128xf32> to vector<128x128xf32>
    %cst_43 = arith.constant dense<0.000000e+00> : vector<16x128xf32>
    %38 = tpu.matmul %35, %37, %cst_43 {dimension_numbers = #tpu.dot_dimension_numbers<[1], [0], [0], [1], [0, 0, 1, 1], [], []>} : vector<16x128xf32>, vector<128x128xf32>, vector<16x128xf32> -> vector<16x128xf32>
    %39 = arith.addf %34, %38 : vector<16x128xf32>
    %c0_44 = arith.constant 0 : index
    %c0_45 = arith.constant 0 : index
    %40 = vector.load %arg5[%c0_44, %c0_45] : memref<1x128xf32, #tpu.memory_space<vmem>>, vector<1x128xf32>
    %41 = vector.broadcast %40 : vector<1x128xf32> to vector<16x128xf32>
    %42 = arith.addf %39, %41 : vector<16x128xf32>
    %43 = arith.addf %42, %21 : vector<16x128xf32>
    %cst_46 = arith.constant dense<0.000000e+00> : vector<128xf32>
    %44 = vector.multi_reduction <add>, %43, %cst_46 [0] : vector<16x128xf32> to vector<128xf32>
    %45 = vector.shape_cast %44 : vector<128xf32> to vector<1x128xf32>
    %c0_47 = arith.constant 0 : index
    %c0_48 = arith.constant 0 : index
    %46 = vector.load %arg6[%c0_47, %c0_48] : memref<128x32xf32, #tpu.memory_space<vmem>>, vector<128x32xf32>
    %cst_49 = arith.constant dense<0.000000e+00> : vector<1x32xf32>
    %47 = tpu.matmul %45, %46, %cst_49 {dimension_numbers = #tpu.dot_dimension_numbers<[1], [0], [0], [1], [0, 0, 1, 1], [], []>} : vector<1x128xf32>, vector<128x32xf32>, vector<1x32xf32> -> vector<1x32xf32>
    %c0_50 = arith.constant 0 : index
    %c0_51 = arith.constant 0 : index
    %48 = vector.load %arg7[%c0_50, %c0_51] : memref<1x32xf32, #tpu.memory_space<vmem>>, vector<1x32xf32>
    %49 = arith.addf %47, %48 : vector<1x32xf32>
    %c0_52 = arith.constant 0 : index
    %c0_53 = arith.constant 0 : index
    %c0_54 = arith.constant 0 : index
    %50 = vector.load %arg8[%c0_52, %c0_53, %c0_54] : memref<1x1x32xf32, #tpu.memory_space<vmem>>, vector<1x1x32xf32>
    %51 = vector.shape_cast %50 : vector<1x1x32xf32> to vector<1x32xf32>
    %52 = vector.shape_cast %49 : vector<1x32xf32> to vector<1x1x32xf32>
    tpu.vector_store %arg8[%c0_52, %c0_53, %c0_54], %52 {strides = array<i32>} : memref<1x1x32xf32, #tpu.memory_space<vmem>>, vector<1x1x32xf32>,
    return
  }
  func.func @transform_0(%arg0: i32) -> (i32, i32, i32) {
    %c0_i32 = arith.constant 0 : i32
    %c0_i32_0 = arith.constant 0 : i32
    %c0_i32_1 = arith.constant 0 : i32
    return %arg0, %c0_i32, %c0_i32_0 : i32, i32, i32
  }
  func.func @transform_1(%arg0: i32) -> (i32, i32, i32) {
    %c0_i32 = arith.constant 0 : i32
    %c0_i32_0 = arith.constant 0 : i32
    %c0_i32_1 = arith.constant 0 : i32
    %c0_i32_2 = arith.constant 0 : i32
    return %c0_i32, %c0_i32_0, %c0_i32_1 : i32, i32, i32
  }
  func.func @transform_2(%arg0: i32) -> (i32, i32) {
    %c0_i32 = arith.constant 0 : i32
    %c0_i32_0 = arith.constant 0 : i32
    %c0_i32_1 = arith.constant 0 : i32
    return %c0_i32, %c0_i32_0 : i32, i32
  }
  func.func @transform_3(%arg0: i32) -> (i32, i32, i32) {
    %c0_i32 = arith.constant 0 : i32
    %c0_i32_0 = arith.constant 0 : i32
    %c0_i32_1 = arith.constant 0 : i32
    %c0_i32_2 = arith.constant 0 : i32
    return %c0_i32, %c0_i32_0, %c0_i32_1 : i32, i32, i32
  }
  func.func @transform_4(%arg0: i32) -> (i32, i32) {
    %c0_i32 = arith.constant 0 : i32
    %c0_i32_0 = arith.constant 0 : i32
    %c0_i32_1 = arith.constant 0 : i32
    return %c0_i32, %c0_i32_0 : i32, i32
  }
  func.func @transform_5(%arg0: i32) -> (i32, i32) {
    %c0_i32 = arith.constant 0 : i32
    %c0_i32_0 = arith.constant 0 : i32
    %c0_i32_1 = arith.constant 0 : i32
    return %c0_i32, %c0_i32_0 : i32, i32
  }
  func.func @transform_6(%arg0: i32) -> (i32, i32) {
    %c0_i32 = arith.constant 0 : i32
    %c0_i32_0 = arith.constant 0 : i32
    %c0_i32_1 = arith.constant 0 : i32
    return %c0_i32, %c0_i32_0 : i32, i32
  }
  func.func @transform_7(%arg0: i32) -> (i32, i32, i32) {
    %c0_i32 = arith.constant 0 : i32
    %c0_i32_0 = arith.constant 0 : i32
    %c0_i32_1 = arith.constant 0 : i32
    return %arg0, %c0_i32, %c0_i32_0 : i32, i32, i32
  }
}

</mosaic_0001>

<llo_original>
// kernel: fused_dag_forward.1
$region0: #{fused_dag_forward.1}
  #allocation0 [shape = 'u32[]', space=smem, size = 0x4, offset = 0x4, fixed_abs, tag = 'smem constant byte address 0x4 - core index']
  #allocation1 [shape = 'u32[144,128]{1,0:T(1,128)}', space=vmem, size = 0x12000, scoped, tag = 'internal scratch']
  #allocation2 [shape = 'f32[18,128]{1,0:T(8,128)}', space=vmem, size = 0x3000, scoped, tag = 'scratch operand']
  %s0 = inlined_call_operand.vmem [shape: f32[2,18,64], index: 0, kind: input, shape index: {}]
  %s1 = inlined_call_operand.vmem [shape: f32[3,64,128], index: 1, kind: input, shape index: {}]
  %s2 = inlined_call_operand.vmem [shape: f32[1,128], index: 2, kind: input, shape index: {}]
  %s3 = inlined_call_operand.vmem [shape: f32[3,128,128], index: 3, kind: input, shape index: {}]
  %s4 = inlined_call_operand.vmem [shape: f32[1,128], index: 4, kind: input, shape index: {}]
  %s5 = inlined_call_operand.vmem [shape: f32[128,32], index: 5, kind: input, shape index: {}]
  %s6 = inlined_call_operand.vmem [shape: f32[1,32], index: 6, kind: input, shape index: {}]
  %s7 = inlined_call_operand.hbm [shape: f32[2,1,32], index: 7, kind: output, shape index: {}]
  %s8 = sld [smem:[#allocation0]]
  $region61: #{fused_dag_forward.1} parent=0
    _
  %s10 = ssub.s32 1, %s8
  %s11 = scalar_select 0, %s10, %s8
  $region1: #{fused_dag_forward.1} parent=0
    #allocation3 [shape = 'u8[1024]{0}', space=vmem, size = 0x400, scoped, tag = 'output window, operand 0']
    #allocation4 [shape = 's32[2]{0}', space=sflag, size = 0x8, scoped, tag = 'scoped memory for fused_dag_forward.1']
    %12 = vsyncpa [#allocation4], 0
    %s13 = scalar_lea.sflag [#allocation4], 1
    %14 = vsyncpa %s13, 0
    loop: start=0, step=1, limit=4
    $region2: #{fused_dag_forward.1} parent=1 // loop_pre_header
      _
    $region3: #{fused_dag_forward.1} parent=1 // loop_header
      %s16 = sphi 0, %s20
      %p17 = scmp.ge.s32.totalorder %s16, 4
      %s26 = sphi 0, %s28
      %s29 = sphi 0, %s26
      %s30 = sphi 0, %s29
      %s46 = sphi 0, %s30
      %s50 = sphi 0, %s50
      %s52 = sphi 0, %s50
      %s53 = sphi 0, %s52
      %s67 = sphi 0, %s53
      %s71 = sphi 0, %s71
      %s73 = sphi 0, %s71
      %s74 = sphi 0, %s73
      %s88 = sphi 0, %s74
      %s92 = sphi 0, %s92
      %s94 = sphi 0, %s92
      %s95 = sphi 0, %s94
      %s109 = sphi 0, %s95
      %s113 = sphi 0, %s113
      %s115 = sphi 0, %s113
      %s116 = sphi 0, %s115
      %s130 = sphi 0, %s116
      %s134 = sphi 0, %s134
      %s136 = sphi 0, %s134
      %s137 = sphi 0, %s136
      %s151 = sphi 0, %s137
      %s155 = sphi 0, %s155
      %s157 = sphi 0, %s155
      %s158 = sphi 0, %s157
      %s172 = sphi 0, %s158
      %s178 = sphi 0, %s180
      %s181 = sphi 0, %s178
      %s182 = sphi 0, %s181
      %s198 = sphi 0, %s182
    $region4: #{fused_dag_forward.1} parent=1 // loop_header_branch
      %19 = sbr.rel (%p17) target = $region8
    $region5: #{fused_dag_forward.1} parent=1 // loop_body
      %s21 = ssub.s32 %s16, 1
      %s22 = ssub.s32 %s16, 2
      %s23 = sadd.s32 %s16, 1
      %s24 = ssub.s32 %s16, %s23
      %p25 = scmp.eq.s32.totalorder %s24, 0
      %s27 = sadd.s32 %s26, 1
      %s28 = scalar_select %p25, %s26, %s27
      %p31 = pneg %p25
      %p32 = scmp.eq.s32.totalorder %s16, 1
      %p33 = por %p31, %p32
      %p34 = scmp.ne.s32.totalorder %s26, %s29
      %p35 = scmp.eq.s32.totalorder %s16, 0
      %p36 = por %p34, %p35
      %p37 = scmp.ne.s32.totalorder %s26, %s29
      %p38 = scmp.eq.s32.totalorder %s21, 1
      %p39 = por %p37, %p38
      %p40 = scmp.ne.s32.totalorder %s29, %s30
      %p41 = scmp.eq.s32.totalorder %s21, 0
      %p42 = por %p40, %p41
      %p43 = scmp.ne.s32.totalorder %s29, %s30
      %p44 = scmp.eq.s32.totalorder %s22, 1
      %p45 = por %p43, %p44
      %p47 = scmp.ne.s32.totalorder %s30, %s46
      %p48 = scmp.eq.s32.totalorder %s22, 0
      %p49 = por %p47, %p48
      %s51 = sadd.s32 %s50, 1
      %p54 = scmp.eq.s32.totalorder %s16, 1
      %p55 = scmp.ne.s32.totalorder %s50, %s52
      %p56 = scmp.eq.s32.totalorder %s16, 0
      %p57 = por %p55, %p56
      %p58 = scmp.ne.s32.totalorder %s50, %s52
      %p59 = scmp.eq.s32.totalorder %s21, 1
      %p60 = por %p58, %p59
      %p61 = scmp.ne.s32.totalorder %s52, %s53
      %p62 = scmp.eq.s32.totalorder %s21, 0
      %p63 = por %p61, %p62
      %p64 = scmp.ne.s32.totalorder %s52, %s53
      %p65 = scmp.eq.s32.totalorder %s22, 1
      %p66 = por %p64, %p65
      %p68 = scmp.ne.s32.totalorder %s53, %s67
      %p69 = scmp.eq.s32.totalorder %s22, 0
      %p70 = por %p68, %p69
      %s72 = sadd.s32 %s71, 1
      %p75 = scmp.eq.s32.totalorder %s16, 1
      %p76 = scmp.ne.s32.totalorder %s71, %s73
      %p77 = scmp.eq.s32.totalorder %s16, 0
      %p78 = por %p76, %p77
      %p79 = scmp.ne.s32.totalorder %s71, %s73
      %p80 = scmp.eq.s32.totalorder %s21, 1
      %p81 = por %p79, %p80
      %p82 = scmp.ne.s32.totalorder %s73, %s74
      %p83 = scmp.eq.s32.totalorder %s21, 0
      %p84 = por %p82, %p83
      %p85 = scmp.ne.s32.totalorder %s73, %s74
      %p86 = scmp.eq.s32.totalorder %s22, 1
      %p87 = por %p85, %p86
      %p89 = scmp.ne.s32.totalorder %s74, %s88
      %p90 = scmp.eq.s32.totalorder %s22, 0
      %p91 = por %p89, %p90
      %s93 = sadd.s32 %s92, 1
      %p96 = scmp.eq.s32.totalorder %s16, 1
      %p97 = scmp.ne.s32.totalorder %s92, %s94
      %p98 = scmp.eq.s32.totalorder %s16, 0
      %p99 = por %p97, %p98
      %p100 = scmp.ne.s32.totalorder %s92, %s94
      %p101 = scmp.eq.s32.totalorder %s21, 1
      %p102 = por %p100, %p101
      %p103 = scmp.ne.s32.totalorder %s94, %s95
      %p104 = scmp.eq.s32.totalorder %s21, 0
      %p105 = por %p103, %p104
      %p106 = scmp.ne.s32.totalorder %s94, %s95
      %p107 = scmp.eq.s32.totalorder %s22, 1
      %p108 = por %p106, %p107
      %p110 = scmp.ne.s32.totalorder %s95, %s109
      %p111 = scmp.eq.s32.totalorder %s22, 0
      %p112 = por %p110, %p111
      %s114 = sadd.s32 %s113, 1
      %p117 = scmp.eq.s32.totalorder %s16, 1
      %p118 = scmp.ne.s32.totalorder %s113, %s115
      %p119 = scmp.eq.s32.totalorder %s16, 0
      %p120 = por %p118, %p119
      %p121 = scmp.ne.s32.totalorder %s113, %s115
      %p122 = scmp.eq.s32.totalorder %s21, 1
      %p123 = por %p121, %p122
      %p124 = scmp.ne.s32.totalorder %s115, %s116
      %p125 = scmp.eq.s32.totalorder %s21, 0
      %p126 = por %p124, %p125
      %p127 = scmp.ne.s32.totalorder %s115, %s116
      %p128 = scmp.eq.s32.totalorder %s22, 1
      %p129 = por %p127, %p128
      %p131 = scmp.ne.s32.totalorder %s116, %s130
      %p132 = scmp.eq.s32.totalorder %s22, 0
      %p133 = por %p131, %p132
      %s135 = sadd.s32 %s134, 1
      %p138 = scmp.eq.s32.totalorder %s16, 1
      %p139 = scmp.ne.s32.totalorder %s134, %s136
      %p140 = scmp.eq.s32.totalorder %s16, 0
      %p141 = por %p139, %p140
      %p142 = scmp.ne.s32.totalorder %s134, %s136
      %p143 = scmp.eq.s32.totalorder %s21, 1
      %p144 = por %p142, %p143
      %p145 = scmp.ne.s32.totalorder %s136, %s137
      %p146 = scmp.eq.s32.totalorder %s21, 0
      %p147 = por %p145, %p146
      %p148 = scmp.ne.s32.totalorder %s136, %s137
      %p149 = scmp.eq.s32.totalorder %s22, 1
      %p150 = por %p148, %p149
      %p152 = scmp.ne.s32.totalorder %s137, %s151
      %p153 = scmp.eq.s32.totalorder %s22, 0
      %p154 = por %p152, %p153
      %s156 = sadd.s32 %s155, 1
      %p159 = scmp.eq.s32.totalorder %s16, 1
      %p160 = scmp.ne.s32.totalorder %s155, %s157
      %p161 = scmp.eq.s32.totalorder %s16, 0
      %p162 = por %p160, %p161
      %p163 = scmp.ne.s32.totalorder %s155, %s157
      %p164 = scmp.eq.s32.totalorder %s21, 1
      %p165 = por %p163, %p164
      %p166 = scmp.ne.s32.totalorder %s157, %s158
      %p167 = scmp.eq.s32.totalorder %s21, 0
      %p168 = por %p166, %p167
      %p169 = scmp.ne.s32.totalorder %s157, %s158
      %p170 = scmp.eq.s32.totalorder %s22, 1
      %p171 = por %p169, %p170
      %p173 = scmp.ne.s32.totalorder %s158, %s172
      %p174 = scmp.eq.s32.totalorder %s22, 0
      %p175 = por %p173, %p174
      %s176 = ssub.s32 %s16, %s23
      %p177 = scmp.eq.s32.totalorder %s176, 0
      %s179 = sadd.s32 %s178, 1
      %s180 = scalar_select %p177, %s178, %s179
      %p183 = pneg %p177
      %p184 = scmp.eq.s32.totalorder %s16, 1
      %p185 = por %p183, %p184
      %p186 = scmp.ne.s32.totalorder %s178, %s181
      %p187 = scmp.eq.s32.totalorder %s16, 0
      %p188 = por %p186, %p187
      %p189 = scmp.ne.s32.totalorder %s178, %s181
      %p190 = scmp.eq.s32.totalorder %s21, 1
      %p191 = por %p189, %p190
      %p192 = scmp.ne.s32.totalorder %s181, %s182
      %p193 = scmp.eq.s32.totalorder %s21, 0
      %p194 = por %p192, %p193
      %p195 = scmp.ne.s32.totalorder %s181, %s182
      %p196 = scmp.eq.s32.totalorder %s22, 1
      %p197 = por %p195, %p196
      %p199 = scmp.ne.s32.totalorder %s182, %s198
      %p200 = scmp.eq.s32.totalorder %s22, 0
      %p201 = por %p199, %p200
      %p202 = scmp.le.s32.totalorder 1, %s16
      %p203 = scmp.lt.s32.totalorder %s16, 3
      %p204 = pnand %p202, %p203
      %p205 = pneg %p204
      // Predicated region
      $region9: #{fused_dag_forward.1} parent=5 // pred_check
        _
      $region10: #{fused_dag_forward.1} parent=5 // pred_check_branch
        %207 = sbr.rel (%p204) target = $region12
      $region11: #{fused_dag_forward.1} parent=5 // pred_region
        %s208 = ssub.s32 %s16, 1
        // Predicated region
        $region13: #{fused_dag_forward.1} parent=11 // pred_check
          %p209 = pneg %p63
        $region14: #{fused_dag_forward.1} parent=11 // pred_check_branch
          %211 = sbr.rel (%p209) target = $region16
        $region15: #{fused_dag_forward.1} parent=11 // pred_region
          _
        $region16: #{fused_dag_forward.1} parent=11 // pred_fallthru
          _
        // Predicated region
        $region17: #{fused_dag_forward.1} parent=11 // pred_check
          %p212 = pneg %p84
        $region18: #{fused_dag_forward.1} parent=11 // pred_check_branch
          %214 = sbr.rel (%p212) target = $region20
        $region19: #{fused_dag_forward.1} parent=11 // pred_region
          _
        $region20: #{fused_dag_forward.1} parent=11 // pred_fallthru
          _
        // Predicated region
        $region21: #{fused_dag_forward.1} parent=11 // pred_check
          %p215 = pneg %p105
        $region22: #{fused_dag_forward.1} parent=11 // pred_check_branch
          %217 = sbr.rel (%p215) target = $region24
        $region23: #{fused_dag_forward.1} parent=11 // pred_region
          _
        $region24: #{fused_dag_forward.1} parent=11 // pred_fallthru
          _
        // Predicated region
        $region25: #{fused_dag_forward.1} parent=11 // pred_check
          %p218 = pneg %p126
        $region26: #{fused_dag_forward.1} parent=11 // pred_check_branch
          %220 = sbr.rel (%p218) target = $region28
        $region27: #{fused_dag_forward.1} parent=11 // pred_region
          _
        $region28: #{fused_dag_forward.1} parent=11 // pred_fallthru
          _
        // Predicated region
        $region29: #{fused_dag_forward.1} parent=11 // pred_check
          %p221 = pneg %p147
        $region30: #{fused_dag_forward.1} parent=11 // pred_check_branch
          %223 = sbr.rel (%p221) target = $region32
        $region31: #{fused_dag_forward.1} parent=11 // pred_region
          _
        $region32: #{fused_dag_forward.1} parent=11 // pred_fallthru
          _
        // Predicated region
        $region33: #{fused_dag_forward.1} parent=11 // pred_check
          %p224 = pneg %p168
        $region34: #{fused_dag_forward.1} parent=11 // pred_check_branch
          %226 = sbr.rel (%p224) target = $region36
        $region35: #{fused_dag_forward.1} parent=11 // pred_region
          _
        $region36: #{fused_dag_forward.1} parent=11 // pred_fallthru
          _
      $region12: #{fused_dag_forward.1} parent=5 // pred_fallthru
        _
      %p227 = scmp.lt.s32.totalorder %s16, 2
      // Predicated region
      $region37: #{fused_dag_forward.1} parent=5 // pred_check
        %p228 = pneg %p227
      $region38: #{fused_dag_forward.1} parent=5 // pred_check_branch
        %230 = sbr.rel (%p228) target = $region40
      $region39: #{fused_dag_forward.1} parent=5 // pred_region
        // Predicated region
        $region41: #{fused_dag_forward.1} parent=39 // pred_check
          %p231 = pneg %p36
        $region42: #{fused_dag_forward.1} parent=39 // pred_check_branch
          %233 = sbr.rel (%p231) target = $region44
        $region43: #{fused_dag_forward.1} parent=39 // pred_region
          %p234 = scmp.lt.s32.totalorder %s16, 1
          %s235 = scalar_select %p234, %s16, 1
          %s236 = smul.addr %s235, 3
          %s237 = smul.addr %s236, 8
          %s238 = scalar_lea.vmem %s0, %s237
        $region44: #{fused_dag_forward.1} parent=39 // pred_fallthru
          _
      $region40: #{fused_dag_forward.1} parent=5 // pred_fallthru
        _
      %p239 = scmp.le.s32.totalorder 1, %s16
      %p240 = scmp.lt.s32.totalorder %s16, 3
      %p241 = pnand %p239, %p240
      %p242 = pneg %p241
      // Predicated region
      $region45: #{fused_dag_forward.1} parent=5 // pred_check
        _
      $region46: #{fused_dag_forward.1} parent=5 // pred_check_branch
        %244 = sbr.rel (%p241) target = $region48
      $region47: #{fused_dag_forward.1} parent=5 // pred_region
        %s245 = ssub.s32 %s16, 1
        %p246 = scmp.lt.s32.totalorder %s21, 1
        %s247 = scalar_select %p246, %s21, 1
        %s248 = smul.addr %s247, 3
        %s249 = smul.addr %s248, 8
        %s250 = scalar_lea.vmem %s0, %s249
        %p251 = pneg %p42
        %p252 = pneg %p39
        %p253 = pneg %p63
        %p254 = pneg %p60
        %p255 = pneg %p84
        %p256 = pneg %p81
        %p257 = pneg %p105
        %p258 = pneg %p102
        %p259 = pneg %p126
        %p260 = pneg %p123
        %p261 = pneg %p147
        %p262 = pneg %p144
        %p263 = pneg %p168
        %p264 = pneg %p165
        %p265 = pneg %p194
        %p266 = pneg %p191
        %s267 = sand.u32 %s181, 1
        %s268 = scalar_lea.sflag [#allocation4], %s267
        %s269 = sand.u32 %s181, 1
        %s270 = scalar_lea.vmem [#allocation3], %s269
        %p271 = scmp.lt.s32.totalorder %s21, 1
        %s272 = scalar_select %p271, %s21, 1
        %s273 = smul.addr %s272, 3
        %s274 = smul.addr %s273, 8
        %s275 = scalar_lea.vmem %s0, %s274
        %v276 = vld [vmem:[%s275] sm:$0xff]
        %v277 = vld [vmem:[%s275 + $0x8] sm:$0xff]
        %v278 = vld [vmem:[%s1] sm:$0xff]
        %v279 = vld [vmem:[%s1 + $0x8] sm:$0xff]
        %v280 = vld [vmem:[%s1 + $0x10] sm:$0xff]
        %v281 = vld [vmem:[%s1 + $0x18] sm:$0xff]
        %v282 = vld [vmem:[%s1 + $0x20] sm:$0xff]
        %v283 = vld [vmem:[%s1 + $0x28] sm:$0xff]
        %v284 = vld [vmem:[%s1 + $0x30] sm:$0xff]
        %v285 = vld [vmem:[%s1 + $0x38] sm:$0xff]
        %v286 = vld [vmem:[%s275 + $0x1] sm:$0xff]
        %v287 = vld [vmem:[%s275 + $0x9] sm:$0xff]
        %s288 = scalar_lea.vmem %s1, 64
        %v289 = vld [vmem:[%s288] sm:$0xff]
        %v290 = vld [vmem:[%s288 + $0x8] sm:$0xff]
        %v291 = vld [vmem:[%s288 + $0x10] sm:$0xff]
        %v292 = vld [vmem:[%s288 + $0x18] sm:$0xff]
        %v293 = vld [vmem:[%s288 + $0x20] sm:$0xff]
        %v294 = vld [vmem:[%s288 + $0x28] sm:$0xff]
        %v295 = vld [vmem:[%s288 + $0x30] sm:$0xff]
        %v296 = vld [vmem:[%s288 + $0x38] sm:$0xff]
        %vm297 = vcmask 523264
        %v299 = vsel %vm297, %v286, 0
        %v302 = vsel %vm297, %v287, 0
        %304 = vmatprep.subr.mxu0 0.0
        %305 = vmatpush1.msra.mxu0 %v289
        %306 = vmatprep.subr.mxu0 0.0
        %307 = vmatpush1.msra.mxu0 %v290
        %308 = vmatprep.subr.mxu0 0.0
        %309 = vmatpush1.msra.mxu0 %v291
        %310 = vmatprep.subr.mxu0 0.0
        %311 = vmatpush1.msra.mxu0 %v292
        %312 = vmatprep.subr.mxu0 0.0
        %313 = vmatpush1.msra.mxu0 %v293
        %314 = vmatprep.subr.mxu0 0.0
        %315 = vmatpush1.msra.mxu0 %v294
        %316 = vmatprep.subr.mxu0 0.0
        %317 = vmatpush1.msra.mxu0 %v295
        %318 = vmatprep.subr.mxu0 0.0
        %319 = vmatpush1.msra.mxu0 %v296
        %320 = vmatprep.subr.mxu0 0.0
        %321 = vmatpush1.msra.mxu0 0.0
        %322 = vmatprep.subr.mxu0 0.0
        %323 = vmatpush1.msra.mxu0 0.0
        %324 = vmatprep.subr.mxu0 0.0
        %325 = vmatpush1.msra.mxu0 0.0
        %326 = vmatprep.subr.mxu0 0.0
        %327 = vmatpush1.msra.mxu0 0.0
        %328 = vmatprep.subr.mxu0 0.0
        %329 = vmatpush1.msra.mxu0 0.0
        %330 = vmatprep.subr.mxu0 0.0
        %331 = vmatpush1.msra.mxu0 0.0
        %332 = vmatprep.subr.mxu0 0.0
        %333 = vmatpush1.msra.mxu0 0.0
        %334 = vmatprep.subr.mxu0 0.0
        %335 = vmatpush1.msra.mxu0 0.0
        %336 = vmatprep.subr.mxu0 0.0
        %337 = vmatpush1.msra.mxu0 0.0
        %338 = vmatprep.subr.mxu0 0.0
        %339 = vmatpush1.msra.mxu0 0.0
        %340 = vmatprep.subr.mxu0 0.0
        %341 = vmatpush1.msra.mxu0 0.0
        %342 = vmatprep.subr.mxu0 0.0
        %343 = vmatpush1.msra.mxu0 0.0
        %344 = vmatprep.subr.mxu0 0.0
        %345 = vmatpush1.msra.mxu0 0.0
        %346 = vmatprep.subr.mxu0 0.0
        %347 = vmatpush1.msra.mxu0 0.0
        %348 = vmatprep.subr.mxu0 0.0
        %349 = vmatpush1.msra.mxu0 0.0
        %350 = vmatprep.subr.mxu0 0.0
        %351 = vmatpush1.msra.mxu0 0.0
        %352 = vmatprep.subr.mxu0 0.0
        %353 = vmatpush1.msra.mxu0 0.0
        %354 = vmatprep.subr.mxu0 0.0
        %355 = vmatpush1.msra.mxu0 0.0
        %356 = vmatprep.subr.mxu0 0.0
        %357 = vmatpush1.msra.mxu0 0.0
        %358 = vmatprep.subr.mxu0 0.0
        %359 = vmatpush1.msra.mxu0 0.0
        %360 = vmatprep.subr.mxu0 0.0
        %361 = vmatpush1.msra.mxu0 0.0
        %362 = vmatprep.subr.mxu0 0.0
        %363 = vmatpush1.msra.mxu0 0.0
        %364 = vmatprep.subr.mxu0 0.0
        %365 = vmatpush1.msra.mxu0 0.0
        %366 = vmatprep.subr.mxu0 0.0
        %367 = vmatpush1.msra.mxu0 0.0
        %368 = vmatprep.mubr.f32.mxu0 0.0
        %369 = vmatmul.mubr.f32.gmra.mrb[0].mxu0 %v299
        %v370 = vpop.f32.mrb[0].mxu0
        %v371 = vadd.f32 0.0, %v370
        %v372 = vpop.f32.mrb[0].mxu0
        %373 = vmatprep.mubr.f32.mxu0 0.0
        %374 = vmatmul.mubr.f32.gmra.mrb[0].mxu0 %v302
        %v375 = vpop.f32.mrb[0].mxu0
        %v376 = vadd.f32 0.0, %v375
        %v377 = vpop.f32.mrb[0].mxu0
        %378 = vdwg.mxu0
        %v380 = vsel %vm297, %v276, 0
        %v383 = vsel %vm297, %v277, 0
        %385 = vmatprep.subr.mxu0 0.0
        %386 = vmatpush1.msra.mxu0 %v278
        %387 = vmatprep.subr.mxu0 0.0
        %388 = vmatpush1.msra.mxu0 %v279
        %389 = vmatprep.subr.mxu0 0.0
        %390 = vmatpush1.msra.mxu0 %v280
        %391 = vmatprep.subr.mxu0 0.0
        %392 = vmatpush1.msra.mxu0 %v281
        %393 = vmatprep.subr.mxu0 0.0
        %394 = vmatpush1.msra.mxu0 %v282
        %395 = vmatprep.subr.mxu0 0.0
        %396 = vmatpush1.msra.mxu0 %v283
        %397 = vmatprep.subr.mxu0 0.0
        %398 = vmatpush1.msra.mxu0 %v284
        %399 = vmatprep.subr.mxu0 0.0
        %400 = vmatpush1.msra.mxu0 %v285
        %401 = vmatprep.subr.mxu0 0.0
        %402 = vmatpush1.msra.mxu0 0.0
        %403 = vmatprep.subr.mxu0 0.0
        %404 = vmatpush1.msra.mxu0 0.0
        %405 = vmatprep.subr.mxu0 0.0
        %406 = vmatpush1.msra.mxu0 0.0
        %407 = vmatprep.subr.mxu0 0.0
        %408 = vmatpush1.msra.mxu0 0.0
        %409 = vmatprep.subr.mxu0 0.0
        %410 = vmatpush1.msra.mxu0 0.0
        %411 = vmatprep.subr.mxu0 0.0
        %412 = vmatpush1.msra.mxu0 0.0
        %413 = vmatprep.subr.mxu0 0.0
        %414 = vmatpush1.msra.mxu0 0.0
        %415 = vmatprep.subr.mxu0 0.0
        %416 = vmatpush1.msra.mxu0 0.0
        %417 = vmatprep.subr.mxu0 0.0
        %418 = vmatpush1.msra.mxu0 0.0
        %419 = vmatprep.subr.mxu0 0.0
        %420 = vmatpush1.msra.mxu0 0.0
        %421 = vmatprep.subr.mxu0 0.0
        %422 = vmatpush1.msra.mxu0 0.0
        %423 = vmatprep.subr.mxu0 0.0
        %424 = vmatpush1.msra.mxu0 0.0
        %425 = vmatprep.subr.mxu0 0.0
        %426 = vmatpush1.msra.mxu0 0.0
        %427 = vmatprep.subr.mxu0 0.0
        %428 = vmatpush1.msra.mxu0 0.0
        %429 = vmatprep.subr.mxu0 0.0
        %430 = vmatpush1.msra.mxu0 0.0
        %431 = vmatprep.subr.mxu0 0.0
        %432 = vmatpush1.msra.mxu0 0.0
        %433 = vmatprep.subr.mxu0 0.0
        %434 = vmatpush1.msra.mxu0 0.0
        %435 = vmatprep.subr.mxu0 0.0
        %436 = vmatpush1.msra.mxu0 0.0
        %437 = vmatprep.subr.mxu0 0.0
        %438 = vmatpush1.msra.mxu0 0.0
        %439 = vmatprep.subr.mxu0 0.0
        %440 = vmatpush1.msra.mxu0 0.0
        %441 = vmatprep.subr.mxu0 0.0
        %442 = vmatpush1.msra.mxu0 0.0
        %443 = vmatprep.subr.mxu0 0.0
        %444 = vmatpush1.msra.mxu0 0.0
        %445 = vmatprep.subr.mxu0 0.0
        %446 = vmatpush1.msra.mxu0 0.0
        %447 = vmatprep.subr.mxu0 0.0
        %448 = vmatpush1.msra.mxu0 0.0
        %449 = vmatprep.mubr.f32.mxu0 0.0
        %450 = vmatmul.mubr.f32.gmra.mrb[0].mxu0 %v380
        %v451 = vpop.f32.mrb[0].mxu0
        %v452 = vadd.f32 %v371, %v451
        %v453 = vpop.f32.mrb[0].mxu0
        %454 = vmatprep.mubr.f32.mxu0 0.0
        %455 = vmatmul.mubr.f32.gmra.mrb[0].mxu0 %v383
        %v456 = vpop.f32.mrb[0].mxu0
        %v457 = vadd.f32 %v376, %v456
        %v458 = vpop.f32.mrb[0].mxu0
        %459 = vdwg.mxu0
        %v460 = vld [vmem:[%s275 + $0x2] sm:$0xff]
        %v461 = vld [vmem:[%s275 + $0xa] sm:$0xff]
        %s462 = scalar_lea.vmem %s1, 128
        %v463 = vld [vmem:[%s462] sm:$0xff]
        %v464 = vld [vmem:[%s462 + $0x8] sm:$0xff]
        %v465 = vld [vmem:[%s462 + $0x10] sm:$0xff]
        %v466 = vld [vmem:[%s462 + $0x18] sm:$0xff]
        %v467 = vld [vmem:[%s462 + $0x20] sm:$0xff]
        %v468 = vld [vmem:[%s462 + $0x28] sm:$0xff]
        %v469 = vld [vmem:[%s462 + $0x30] sm:$0xff]
        %v470 = vld [vmem:[%s462 + $0x38] sm:$0xff]
        %v472 = vsel %vm297, %v460, 0
        %v475 = vsel %vm297, %v461, 0
        %477 = vmatprep.subr.mxu0 0.0
        %478 = vmatpush1.msra.mxu0 %v463
        %479 = vmatprep.subr.mxu0 0.0
        %480 = vmatpush1.msra.mxu0 %v464
        %481 = vmatprep.subr.mxu0 0.0
        %482 = vmatpush1.msra.mxu0 %v465
        %483 = vmatprep.subr.mxu0 0.0
        %484 = vmatpush1.msra.mxu0 %v466
        %485 = vmatprep.subr.mxu0 0.0
        %486 = vmatpush1.msra.mxu0 %v467
        %487 = vmatprep.subr.mxu0 0.0
        %488 = vmatpush1.msra.mxu0 %v468
        %489 = vmatprep.subr.mxu0 0.0
        %490 = vmatpush1.msra.mxu0 %v469
        %491 = vmatprep.subr.mxu0 0.0
        %492 = vmatpush1.msra.mxu0 %v470
        %493 = vmatprep.subr.mxu0 0.0
        %494 = vmatpush1.msra.mxu0 0.0
        %495 = vmatprep.subr.mxu0 0.0
        %496 = vmatpush1.msra.mxu0 0.0
        %497 = vmatprep.subr.mxu0 0.0
        %498 = vmatpush1.msra.mxu0 0.0
        %499 = vmatprep.subr.mxu0 0.0
        %500 = vmatpush1.msra.mxu0 0.0
        %501 = vmatprep.subr.mxu0 0.0
        %502 = vmatpush1.msra.mxu0 0.0
        %503 = vmatprep.subr.mxu0 0.0
        %504 = vmatpush1.msra.mxu0 0.0
        %505 = vmatprep.subr.mxu0 0.0
        %506 = vmatpush1.msra.mxu0 0.0
        %507 = vmatprep.subr.mxu0 0.0
        %508 = vmatpush1.msra.mxu0 0.0
        %509 = vmatprep.subr.mxu0 0.0
        %510 = vmatpush1.msra.mxu0 0.0
        %511 = vmatprep.subr.mxu0 0.0
        %512 = vmatpush1.msra.mxu0 0.0
        %513 = vmatprep.subr.mxu0 0.0
        %514 = vmatpush1.msra.mxu0 0.0
        %515 = vmatprep.subr.mxu0 0.0
        %516 = vmatpush1.msra.mxu0 0.0
        %517 = vmatprep.subr.mxu0 0.0
        %518 = vmatpush1.msra.mxu0 0.0
        %519 = vmatprep.subr.mxu0 0.0
        %520 = vmatpush1.msra.mxu0 0.0
        %521 = vmatprep.subr.mxu0 0.0
        %522 = vmatpush1.msra.mxu0 0.0
        %523 = vmatprep.subr.mxu0 0.0
        %524 = vmatpush1.msra.mxu0 0.0
        %525 = vmatprep.subr.mxu0 0.0
        %526 = vmatpush1.msra.mxu0 0.0
        %527 = vmatprep.subr.mxu0 0.0
        %528 = vmatpush1.msra.mxu0 0.0
        %529 = vmatprep.subr.mxu0 0.0
        %530 = vmatpush1.msra.mxu0 0.0
        %531 = vmatprep.subr.mxu0 0.0
        %532 = vmatpush1.msra.mxu0 0.0
        %533 = vmatprep.subr.mxu0 0.0
        %534 = vmatpush1.msra.mxu0 0.0
        %535 = vmatprep.subr.mxu0 0.0
        %536 = vmatpush1.msra.mxu0 0.0
        %537 = vmatprep.subr.mxu0 0.0
        %538 = vmatpush1.msra.mxu0 0.0
        %539 = vmatprep.subr.mxu0 0.0
        %540 = vmatpush1.msra.mxu0 0.0
        %541 = vmatprep.mubr.f32.mxu0 0.0
        %542 = vmatmul.mubr.f32.gmra.mrb[0].mxu0 %v472
        %v543 = vpop.f32.mrb[0].mxu0
        %v544 = vadd.f32 0.0, %v543
        %v545 = vpop.f32.mrb[0].mxu0
        %546 = vmatprep.mubr.f32.mxu0 0.0
        %547 = vmatmul.mubr.f32.gmra.mrb[0].mxu0 %v475
        %v548 = vpop.f32.mrb[0].mxu0
        %v549 = vadd.f32 0.0, %v548
        %v550 = vpop.f32.mrb[0].mxu0
        %551 = vdwg.mxu0
        %v552 = vadd.f32 %v452, %v544
        %v553 = vadd.f32 %v457, %v549
        %v554 = vld [vmem:[%s2] sm:$0x1]
        %v556 = vlaneseq
        %v557 = vshrl.u32 %v556, 7
        %v558 = vsub.s32 0, %v557
        %v559 = vrot.slane %v554, %v558
        %v561 = vadd.f32 %v552, %v559
        %v562 = vadd.f32 %v553, %v559
        %v563 = vmax.f32 %v561, 0.0
        %v564 = vmax.f32 %v562, 0.0
        %565 = vst [vmem:[#allocation2] sm:$0x1] 0.0
        %566 = vst [vmem:[#allocation2 + $0x11] sm:$0x1] 0.0
        %567 = vst [vmem:[#allocation2 + $0x1] sm:$0xff] %v563
        %568 = vst [vmem:[#allocation2 + $0x9] sm:$0xff] %v564
        %v569 = vld [vmem:[#allocation2] sm:$0xff]
        %v570 = vld [vmem:[#allocation2 + $0x8] sm:$0xff]
        %v571 = vld [vmem:[%s3] sm:$0xff]
        %v572 = vld [vmem:[%s3 + $0x8] sm:$0xff]
        %v573 = vld [vmem:[%s3 + $0x10] sm:$0xff]
        %v574 = vld [vmem:[%s3 + $0x18] sm:$0xff]
        %v575 = vld [vmem:[%s3 + $0x20] sm:$0xff]
        %v576 = vld [vmem:[%s3 + $0x28] sm:$0xff]
        %v577 = vld [vmem:[%s3 + $0x30] sm:$0xff]
        %v578 = vld [vmem:[%s3 + $0x38] sm:$0xff]
        %v579 = vld [vmem:[%s3 + $0x40] sm:$0xff]
        %v580 = vld [vmem:[%s3 + $0x48] sm:$0xff]
        %v581 = vld [vmem:[%s3 + $0x50] sm:$0xff]
        %v582 = vld [vmem:[%s3 + $0x58] sm:$0xff]
        %v583 = vld [vmem:[%s3 + $0x60] sm:$0xff]
        %v584 = vld [vmem:[%s3 + $0x68] sm:$0xff]
        %v585 = vld [vmem:[%s3 + $0x70] sm:$0xff]
        %v586 = vld [vmem:[%s3 + $0x78] sm:$0xff]
        %v587 = vld [vmem:[#allocation2 + $0x1] sm:$0xff]
        %v588 = vld [vmem:[#allocation2 + $0x9] sm:$0xff]
        %s589 = scalar_lea.vmem %s3, 128
        %v590 = vld [vmem:[%s589] sm:$0xff]
        %v591 = vld [vmem:[%s589 + $0x8] sm:$0xff]
        %v592 = vld [vmem:[%s589 + $0x10] sm:$0xff]
        %v593 = vld [vmem:[%s589 + $0x18] sm:$0xff]
        %v594 = vld [vmem:[%s589 + $0x20] sm:$0xff]
        %v595 = vld [vmem:[%s589 + $0x28] sm:$0xff]
        %v596 = vld [vmem:[%s589 + $0x30] sm:$0xff]
        %v597 = vld [vmem:[%s589 + $0x38] sm:$0xff]
        %v598 = vld [vmem:[%s589 + $0x40] sm:$0xff]
        %v599 = vld [vmem:[%s589 + $0x48] sm:$0xff]
        %v600 = vld [vmem:[%s589 + $0x50] sm:$0xff]
        %v601 = vld [vmem:[%s589 + $0x58] sm:$0xff]
        %v602 = vld [vmem:[%s589 + $0x60] sm:$0xff]
        %v603 = vld [vmem:[%s589 + $0x68] sm:$0xff]
        %v604 = vld [vmem:[%s589 + $0x70] sm:$0xff]
        %v605 = vld [vmem:[%s589 + $0x78] sm:$0xff]
        %606 = vmatprep.subr.mxu0 0.0
        %607 = vmatpush1.msra.mxu0 %v590
        %608 = vmatprep.subr.mxu0 0.0
        %609 = vmatpush1.msra.mxu0 %v591
        %610 = vmatprep.subr.mxu0 0.0
        %611 = vmatpush1.msra.mxu0 %v592
        %612 = vmatprep.subr.mxu0 0.0
        %613 = vmatpush1.msra.mxu0 %v593
        %614 = vmatprep.subr.mxu0 0.0
        %615 = vmatpush1.msra.mxu0 %v594
        %616 = vmatprep.subr.mxu0 0.0
        %617 = vmatpush1.msra.mxu0 %v595
        %618 = vmatprep.subr.mxu0 0.0
        %619 = vmatpush1.msra.mxu0 %v596
        %620 = vmatprep.subr.mxu0 0.0
        %621 = vmatpush1.msra.mxu0 %v597
        %622 = vmatprep.subr.mxu0 0.0
        %623 = vmatpush1.msra.mxu0 %v598
        %624 = vmatprep.subr.mxu0 0.0
        %625 = vmatpush1.msra.mxu0 %v599
        %626 = vmatprep.subr.mxu0 0.0
        %627 = vmatpush1.msra.mxu0 %v600
        %628 = vmatprep.subr.mxu0 0.0
        %629 = vmatpush1.msra.mxu0 %v601
        %630 = vmatprep.subr.mxu0 0.0
        %631 = vmatpush1.msra.mxu0 %v602
        %632 = vmatprep.subr.mxu0 0.0
        %633 = vmatpush1.msra.mxu0 %v603
        %634 = vmatprep.subr.mxu0 0.0
        %635 = vmatpush1.msra.mxu0 %v604
        %636 = vmatprep.subr.mxu0 0.0
        %637 = vmatpush1.msra.mxu0 %v605
        %638 = vmatprep.subr.mxu0 0.0
        %639 = vmatpush1.msra.mxu0 0.0
        %640 = vmatprep.subr.mxu0 0.0
        %641 = vmatpush1.msra.mxu0 0.0
        %642 = vmatprep.subr.mxu0 0.0
        %643 = vmatpush1.msra.mxu0 0.0
        %644 = vmatprep.subr.mxu0 0.0
        %645 = vmatpush1.msra.mxu0 0.0
        %646 = vmatprep.subr.mxu0 0.0
        %647 = vmatpush1.msra.mxu0 0.0
        %648 = vmatprep.subr.mxu0 0.0
        %649 = vmatpush1.msra.mxu0 0.0
        %650 = vmatprep.subr.mxu0 0.0
        %651 = vmatpush1.msra.mxu0 0.0
        %652 = vmatprep.subr.mxu0 0.0
        %653 = vmatpush1.msra.mxu0 0.0
        %654 = vmatprep.subr.mxu0 0.0
        %655 = vmatpush1.msra.mxu0 0.0
        %656 = vmatprep.subr.mxu0 0.0
        %657 = vmatpush1.msra.mxu0 0.0
        %658 = vmatprep.subr.mxu0 0.0
        %659 = vmatpush1.msra.mxu0 0.0
        %660 = vmatprep.subr.mxu0 0.0
        %661 = vmatpush1.msra.mxu0 0.0
        %662 = vmatprep.subr.mxu0 0.0
        %663 = vmatpush1.msra.mxu0 0.0
        %664 = vmatprep.subr.mxu0 0.0
        %665 = vmatpush1.msra.mxu0 0.0
        %666 = vmatprep.subr.mxu0 0.0
        %667 = vmatpush1.msra.mxu0 0.0
        %668 = vmatprep.subr.mxu0 0.0
        %669 = vmatpush1.msra.mxu0 0.0
        %670 = vmatprep.mubr.f32.mxu0 0.0
        %671 = vmatmul.mubr.f32.gmra.mrb[0].mxu0 %v587
        %v672 = vpop.f32.mrb[0].mxu0
        %v673 = vadd.f32 0.0, %v672
        %v674 = vpop.f32.mrb[0].mxu0
        %675 = vmatprep.mubr.f32.mxu0 0.0
        %676 = vmatmul.mubr.f32.gmra.mrb[0].mxu0 %v588
        %v677 = vpop.f32.mrb[0].mxu0
        %v678 = vadd.f32 0.0, %v677
        %v679 = vpop.f32.mrb[0].mxu0
        %680 = vdwg.mxu0
        %681 = vmatprep.subr.mxu0 0.0
        %682 = vmatpush1.msra.mxu0 %v571
        %683 = vmatprep.subr.mxu0 0.0
        %684 = vmatpush1.msra.mxu0 %v572
        %685 = vmatprep.subr.mxu0 0.0
        %686 = vmatpush1.msra.mxu0 %v573
        %687 = vmatprep.subr.mxu0 0.0
        %688 = vmatpush1.msra.mxu0 %v574
        %689 = vmatprep.subr.mxu0 0.0
        %690 = vmatpush1.msra.mxu0 %v575
        %691 = vmatprep.subr.mxu0 0.0
        %692 = vmatpush1.msra.mxu0 %v576
        %693 = vmatprep.subr.mxu0 0.0
        %694 = vmatpush1.msra.mxu0 %v577
        %695 = vmatprep.subr.mxu0 0.0
        %696 = vmatpush1.msra.mxu0 %v578
        %697 = vmatprep.subr.mxu0 0.0
        %698 = vmatpush1.msra.mxu0 %v579
        %699 = vmatprep.subr.mxu0 0.0
        %700 = vmatpush1.msra.mxu0 %v580
        %701 = vmatprep.subr.mxu0 0.0
        %702 = vmatpush1.msra.mxu0 %v581
        %703 = vmatprep.subr.mxu0 0.0
        %704 = vmatpush1.msra.mxu0 %v582
        %705 = vmatprep.subr.mxu0 0.0
        %706 = vmatpush1.msra.mxu0 %v583
        %707 = vmatprep.subr.mxu0 0.0
        %708 = vmatpush1.msra.mxu0 %v584
        %709 = vmatprep.subr.mxu0 0.0
        %710 = vmatpush1.msra.mxu0 %v585
        %711 = vmatprep.subr.mxu0 0.0
        %712 = vmatpush1.msra.mxu0 %v586
        %713 = vmatprep.subr.mxu0 0.0
        %714 = vmatpush1.msra.mxu0 0.0
        %715 = vmatprep.subr.mxu0 0.0
        %716 = vmatpush1.msra.mxu0 0.0
        %717 = vmatprep.subr.mxu0 0.0
        %718 = vmatpush1.msra.mxu0 0.0
        %719 = vmatprep.subr.mxu0 0.0
        %720 = vmatpush1.msra.mxu0 0.0
        %721 = vmatprep.subr.mxu0 0.0
        %722 = vmatpush1.msra.mxu0 0.0
        %723 = vmatprep.subr.mxu0 0.0
        %724 = vmatpush1.msra.mxu0 0.0
        %725 = vmatprep.subr.mxu0 0.0
        %726 = vmatpush1.msra.mxu0 0.0
        %727 = vmatprep.subr.mxu0 0.0
        %728 = vmatpush1.msra.mxu0 0.0
        %729 = vmatprep.subr.mxu0 0.0
        %730 = vmatpush1.msra.mxu0 0.0
        %731 = vmatprep.subr.mxu0 0.0
        %732 = vmatpush1.msra.mxu0 0.0
        %733 = vmatprep.subr.mxu0 0.0
        %734 = vmatpush1.msra.mxu0 0.0
        %735 = vmatprep.subr.mxu0 0.0
        %736 = vmatpush1.msra.mxu0 0.0
        %737 = vmatprep.subr.mxu0 0.0
        %738 = vmatpush1.msra.mxu0 0.0
        %739 = vmatprep.subr.mxu0 0.0
        %740 = vmatpush1.msra.mxu0 0.0
        %741 = vmatprep.subr.mxu0 0.0
        %742 = vmatpush1.msra.mxu0 0.0
        %743 = vmatprep.subr.mxu0 0.0
        %744 = vmatpush1.msra.mxu0 0.0
        %745 = vmatprep.mubr.f32.mxu0 0.0
        %746 = vmatmul.mubr.f32.gmra.mrb[0].mxu0 %v569
        %v747 = vpop.f32.mrb[0].mxu0
        %v748 = vadd.f32 %v673, %v747
        %v749 = vpop.f32.mrb[0].mxu0
        %750 = vmatprep.mubr.f32.mxu0 0.0
        %751 = vmatmul.mubr.f32.gmra.mrb[0].mxu0 %v570
        %v752 = vpop.f32.mrb[0].mxu0
        %v753 = vadd.f32 %v678, %v752
        %v754 = vpop.f32.mrb[0].mxu0
        %755 = vdwg.mxu0
        %v756 = vld [vmem:[#allocation2 + $0x2] sm:$0xff]
        %v757 = vld [vmem:[#allocation2 + $0xa] sm:$0xff]
        %s758 = scalar_lea.vmem %s3, 256
        %v759 = vld [vmem:[%s758] sm:$0xff]
        %v760 = vld [vmem:[%s758 + $0x8] sm:$0xff]
        %v761 = vld [vmem:[%s758 + $0x10] sm:$0xff]
        %v762 = vld [vmem:[%s758 + $0x18] sm:$0xff]
        %v763 = vld [vmem:[%s758 + $0x20] sm:$0xff]
        %v764 = vld [vmem:[%s758 + $0x28] sm:$0xff]
        %v765 = vld [vmem:[%s758 + $0x30] sm:$0xff]
        %v766 = vld [vmem:[%s758 + $0x38] sm:$0xff]
        %v767 = vld [vmem:[%s758 + $0x40] sm:$0xff]
        %v768 = vld [vmem:[%s758 + $0x48] sm:$0xff]
        %v769 = vld [vmem:[%s758 + $0x50] sm:$0xff]
        %v770 = vld [vmem:[%s758 + $0x58] sm:$0xff]
        %v771 = vld [vmem:[%s758 + $0x60] sm:$0xff]
        %v772 = vld [vmem:[%s758 + $0x68] sm:$0xff]
        %v773 = vld [vmem:[%s758 + $0x70] sm:$0xff]
        %v774 = vld [vmem:[%s758 + $0x78] sm:$0xff]
        %775 = vmatprep.subr.mxu0 0.0
        %776 = vmatpush1.msra.mxu0 %v759
        %777 = vmatprep.subr.mxu0 0.0
        %778 = vmatpush1.msra.mxu0 %v760
        %779 = vmatprep.subr.mxu0 0.0
        %780 = vmatpush1.msra.mxu0 %v761
        %781 = vmatprep.subr.mxu0 0.0
        %782 = vmatpush1.msra.mxu0 %v762
        %783 = vmatprep.subr.mxu0 0.0
        %784 = vmatpush1.msra.mxu0 %v763
        %785 = vmatprep.subr.mxu0 0.0
        %786 = vmatpush1.msra.mxu0 %v764
        %787 = vmatprep.subr.mxu0 0.0
        %788 = vmatpush1.msra.mxu0 %v765
        %789 = vmatprep.subr.mxu0 0.0
        %790 = vmatpush1.msra.mxu0 %v766
        %791 = vmatprep.subr.mxu0 0.0
        %792 = vmatpush1.msra.mxu0 %v767
        %793 = vmatprep.subr.mxu0 0.0
        %794 = vmatpush1.msra.mxu0 %v768
        %795 = vmatprep.subr.mxu0 0.0
        %796 = vmatpush1.msra.mxu0 %v769
        %797 = vmatprep.subr.mxu0 0.0
        %798 = vmatpush1.msra.mxu0 %v770
        %799 = vmatprep.subr.mxu0 0.0
        %800 = vmatpush1.msra.mxu0 %v771
        %801 = vmatprep.subr.mxu0 0.0
        %802 = vmatpush1.msra.mxu0 %v772
        %803 = vmatprep.subr.mxu0 0.0
        %804 = vmatpush1.msra.mxu0 %v773
        %805 = vmatprep.subr.mxu0 0.0
        %806 = vmatpush1.msra.mxu0 %v774
        %807 = vmatprep.subr.mxu0 0.0
        %808 = vmatpush1.msra.mxu0 0.0
        %809 = vmatprep.subr.mxu0 0.0
        %810 = vmatpush1.msra.mxu0 0.0
        %811 = vmatprep.subr.mxu0 0.0
        %812 = vmatpush1.msra.mxu0 0.0
        %813 = vmatprep.subr.mxu0 0.0
        %814 = vmatpush1.msra.mxu0 0.0
        %815 = vmatprep.subr.mxu0 0.0
        %816 = vmatpush1.msra.mxu0 0.0
        %817 = vmatprep.subr.mxu0 0.0
        %818 = vmatpush1.msra.mxu0 0.0
        %819 = vmatprep.subr.mxu0 0.0
        %820 = vmatpush1.msra.mxu0 0.0
        %821 = vmatprep.subr.mxu0 0.0
        %822 = vmatpush1.msra.mxu0 0.0
        %823 = vmatprep.subr.mxu0 0.0
        %824 = vmatpush1.msra.mxu0 0.0
        %825 = vmatprep.subr.mxu0 0.0
        %826 = vmatpush1.msra.mxu0 0.0
        %827 = vmatprep.subr.mxu0 0.0
        %828 = vmatpush1.msra.mxu0 0.0
        %829 = vmatprep.subr.mxu0 0.0
        %830 = vmatpush1.msra.mxu0 0.0
        %831 = vmatprep.subr.mxu0 0.0
        %832 = vmatpush1.msra.mxu0 0.0
        %833 = vmatprep.subr.mxu0 0.0
        %834 = vmatpush1.msra.mxu0 0.0
        %835 = vmatprep.subr.mxu0 0.0
        %836 = vmatpush1.msra.mxu0 0.0
        %837 = vmatprep.subr.mxu0 0.0
        %838 = vmatpush1.msra.mxu0 0.0
        %839 = vmatprep.mubr.f32.mxu0 0.0
        %840 = vmatmul.mubr.f32.gmra.mrb[0].mxu0 %v756
        %v841 = vpop.f32.mrb[0].mxu0
        %v842 = vadd.f32 0.0, %v841
        %v843 = vpop.f32.mrb[0].mxu0
        %844 = vmatprep.mubr.f32.mxu0 0.0
        %845 = vmatmul.mubr.f32.gmra.mrb[0].mxu0 %v757
        %v846 = vpop.f32.mrb[0].mxu0
        %v847 = vadd.f32 0.0, %v846
        %v848 = vpop.f32.mrb[0].mxu0
        %849 = vdwg.mxu0
        %v850 = vadd.f32 %v748, %v842
        %v851 = vadd.f32 %v753, %v847
        %v852 = vld [vmem:[%s4] sm:$0x1]
        %v854 = vlaneseq
        %v855 = vshrl.u32 %v854, 7
        %v856 = vsub.s32 0, %v855
        %v857 = vrot.slane %v852, %v856
        %v859 = vadd.f32 %v850, %v857
        %v860 = vadd.f32 %v851, %v857
        %v861 = vadd.f32 %v859, %v563
        %v862 = vadd.f32 %v860, %v564
        %v863 = vadd.f32 %v861, %v862
        %v864 = vrot.slane %v863, 4
        %v865 = vadd.f32 %v863, %v864
        %v866 = vrot.slane %v865, 2
        %v867 = vadd.f32 %v865, %v866
        %v868 = vrot.slane %v867, 1
        %v869 = vadd.f32 %v867, %v868
        %v870 = vld [vmem:[%s5] sm:$0xff]
        %v871 = vld [vmem:[%s5 + $0x8] sm:$0xff]
        %v872 = vld [vmem:[%s5 + $0x10] sm:$0xff]
        %v873 = vld [vmem:[%s5 + $0x18] sm:$0xff]
        %v874 = vld [vmem:[%s5 + $0x20] sm:$0xff]
        %v875 = vld [vmem:[%s5 + $0x28] sm:$0xff]
        %v876 = vld [vmem:[%s5 + $0x30] sm:$0xff]
        %v877 = vld [vmem:[%s5 + $0x38] sm:$0xff]
        %v878 = vld [vmem:[%s5 + $0x40] sm:$0xff]
        %v879 = vld [vmem:[%s5 + $0x48] sm:$0xff]
        %v880 = vld [vmem:[%s5 + $0x50] sm:$0xff]
        %v881 = vld [vmem:[%s5 + $0x58] sm:$0xff]
        %v882 = vld [vmem:[%s5 + $0x60] sm:$0xff]
        %v883 = vld [vmem:[%s5 + $0x68] sm:$0xff]
        %v884 = vld [vmem:[%s5 + $0x70] sm:$0xff]
        %v885 = vld [vmem:[%s5 + $0x78] sm:$0xff]
        %v886 = vld [vmem:[%s6] sm:$0x1]
        %887 = vmatprep.subr.mxu0 0.0
        %888 = vmatpush1.msra.mxu0 %v870
        %889 = vmatprep.subr.mxu0 0.0
        %890 = vmatpush1.msra.mxu0 %v871
        %891 = vmatprep.subr.mxu0 0.0
        %892 = vmatpush1.msra.mxu0 %v872
        %893 = vmatprep.subr.mxu0 0.0
        %894 = vmatpush1.msra.mxu0 %v873
        %895 = vmatprep.subr.mxu0 0.0
        %896 = vmatpush1.msra.mxu0 %v874
        %897 = vmatprep.subr.mxu0 0.0
        %898 = vmatpush1.msra.mxu0 %v875
        %899 = vmatprep.subr.mxu0 0.0
        %900 = vmatpush1.msra.mxu0 %v876
        %901 = vmatprep.subr.mxu0 0.0
        %902 = vmatpush1.msra.mxu0 %v877
        %903 = vmatprep.subr.mxu0 0.0
        %904 = vmatpush1.msra.mxu0 %v878
        %905 = vmatprep.subr.mxu0 0.0
        %906 = vmatpush1.msra.mxu0 %v879
        %907 = vmatprep.subr.mxu0 0.0
        %908 = vmatpush1.msra.mxu0 %v880
        %909 = vmatprep.subr.mxu0 0.0
        %910 = vmatpush1.msra.mxu0 %v881
        %911 = vmatprep.subr.mxu0 0.0
        %912 = vmatpush1.msra.mxu0 %v882
        %913 = vmatprep.subr.mxu0 0.0
        %914 = vmatpush1.msra.mxu0 %v883
        %915 = vmatprep.subr.mxu0 0.0
        %916 = vmatpush1.msra.mxu0 %v884
        %917 = vmatprep.subr.mxu0 0.0
        %918 = vmatpush1.msra.mxu0 %v885
        %919 = vmatprep.subr.mxu0 0.0
        %920 = vmatpush1.msra.mxu0 0.0
        %921 = vmatprep.subr.mxu0 0.0
        %922 = vmatpush1.msra.mxu0 0.0
        %923 = vmatprep.subr.mxu0 0.0
        %924 = vmatpush1.msra.mxu0 0.0
        %925 = vmatprep.subr.mxu0 0.0
        %926 = vmatpush1.msra.mxu0 0.0
        %927 = vmatprep.subr.mxu0 0.0
        %928 = vmatpush1.msra.mxu0 0.0
        %929 = vmatprep.subr.mxu0 0.0
        %930 = vmatpush1.msra.mxu0 0.0
        %931 = vmatprep.subr.mxu0 0.0
        %932 = vmatpush1.msra.mxu0 0.0
        %933 = vmatprep.subr.mxu0 0.0
        %934 = vmatpush1.msra.mxu0 0.0
        %935 = vmatprep.subr.mxu0 0.0
        %936 = vmatpush1.msra.mxu0 0.0
        %937 = vmatprep.subr.mxu0 0.0
        %938 = vmatpush1.msra.mxu0 0.0
        %939 = vmatprep.subr.mxu0 0.0
        %940 = vmatpush1.msra.mxu0 0.0
        %941 = vmatprep.subr.mxu0 0.0
        %942 = vmatpush1.msra.mxu0 0.0
        %943 = vmatprep.subr.mxu0 0.0
        %944 = vmatpush1.msra.mxu0 0.0
        %945 = vmatprep.subr.mxu0 0.0
        %946 = vmatpush1.msra.mxu0 0.0
        %947 = vmatprep.subr.mxu0 0.0
        %948 = vmatpush1.msra.mxu0 0.0
        %949 = vmatprep.subr.mxu0 0.0
        %950 = vmatpush1.msra.mxu0 0.0
        %951 = vmatprep.mubr.f32.mxu0 0.0
        %952 = vmatmul.mubr.f32.gmra.mrb[0].mxu0 %v869
        %v953 = vpop.f32.mrb[0].mxu0
        %v954 = vadd.f32 %v886, %v953
        %v955 = vpop.f32.mrb[0].mxu0
        %956 = vdwg.mxu0
        %vm957 = vcmask 253952
        %958 = vst.msk [vmem:[%s270] sm:$0x1] %vm957, %v954
        %s959 = sand.u32 %s181, 1
        %s960 = scalar_lea.sflag [#allocation4], %s959
        %s961 = sand.u32 %s181, 1
        %s962 = scalar_lea.vmem [#allocation3], %s961
        // Predicated region
        $region49: #{fused_dag_forward.1} parent=47 // pred_check
          %p963 = pneg %p191
        $region50: #{fused_dag_forward.1} parent=47 // pred_check_branch
          %965 = sbr.rel (%p963) target = $region52
        $region51: #{fused_dag_forward.1} parent=47 // pred_region
          %s967 = ssub.s32 16, 16
          %968 = vsyncadd %s960, %s967
          %s969 = smul.addr %s21, 16
          %s970 = scalar_lea.hbm %s7, %s969
          %s972 = sshll.u32 %s962, 4
          %s973 = int_to_ptr.vmem [resolvable:$true] %s972
          %975 = dma.vmem_to_hbm [thread:$0]  %s973, 16, %s970, %s960
        $region52: #{fused_dag_forward.1} parent=47 // pred_fallthru
          _
      $region48: #{fused_dag_forward.1} parent=5 // pred_fallthru
        _
      %p976 = scmp.le.s32.totalorder 2, %s16
      // Predicated region
      $region53: #{fused_dag_forward.1} parent=5 // pred_check
        %p977 = pneg %p976
      $region54: #{fused_dag_forward.1} parent=5 // pred_check_branch
        %979 = sbr.rel (%p977) target = $region56
      $region55: #{fused_dag_forward.1} parent=5 // pred_region
        %s980 = ssub.s32 %s16, 2
        // Predicated region
        $region57: #{fused_dag_forward.1} parent=55 // pred_check
          %p981 = pneg %p197
        $region58: #{fused_dag_forward.1} parent=55 // pred_check_branch
          %983 = sbr.rel (%p981) target = $region60
        $region59: #{fused_dag_forward.1} parent=55 // pred_region
          %s984 = sand.u32 %s182, 1
          %s985 = scalar_lea.sflag [#allocation4], %s984
          %s986 = sand.u32 %s182, 1
          %s987 = scalar_lea.vmem [#allocation3], %s986
          %988 = dma.done %s985, 16
        $region60: #{fused_dag_forward.1} parent=55 // pred_fallthru
          _
      $region56: #{fused_dag_forward.1} parent=5 // pred_fallthru
        _
    $region6: #{fused_dag_forward.1} parent=1 // loop_footer
      %s20 = sadd.s32 1, %s16
    $region7: #{fused_dag_forward.1} parent=1 // loop_footer_branch
      %15 = sbr.rel target = $region3
    $region8: #{fused_dag_forward.1} parent=1 // loop_exit
      _
    %989 = vsyncpa [#allocation4], 1
    %s990 = scalar_lea.sflag [#allocation4], 1
    %991 = vsyncpa %s990, 1

</llo_original>
